<compile_context>
chip_gen: v5e
topology: v5e:2x2
jax: 0.10.0
libtpu: 0.0.40
codegen_flags: <defaults>
</compile_context>

<pallas_src>
import math

import jax
import jax.numpy as jnp
from jax.experimental import pallas as pl
from jax.experimental.pallas import tpu as pltpu


def _round_up(x, m):
    return ((x + m - 1) // m) * m


def crf_kernel(x_ref, w_ref, tb_ref, out_ref):
    # x_ref  : (TR, P*H)  packed input rows (P tokens per row), input dtype
    # w_ref  : (P*H, L)   block-diagonal emission weight, L = P*T*T, input dtype
    # tb_ref : (1, L)     tiled (transition + bias) constant, f32
    # out_ref: (TR, L)    lane-dense output slab (lane dim multiple of 128)
    acc = jnp.dot(x_ref[...], w_ref[...], preferred_element_type=jnp.float32)
    out_ref[...] = (acc + tb_ref[...]).astype(out_ref.dtype)


def crf_forward(x, weight, bias, transition, *, tokens_per_tile=8192,
                out_dtype=None):
    """x: (B, S, H); weight: (T, H) [PyTorch Linear layout]; bias: (T,);
    transition: (T, T).  Returns (B, S, T, T) scores.

    out_dtype defaults to x's dtype; pass jnp.bfloat16 to halve the dominant
    HBM store traffic (accumulation stays f32)."""
    B, S, H = x.shape
    T = transition.shape[0]
    M = B * S
    TT = T * T

    f32 = jnp.float32
    if jnp.dtype(x.dtype) not in (jnp.dtype(jnp.float32), jnp.dtype(jnp.bfloat16)):
        x = x.astype(f32)
    in_dtype = x.dtype
    out_dtype = jnp.dtype(in_dtype if out_dtype is None else out_dtype)
    in_b = jnp.dtype(in_dtype).itemsize
    out_b = out_dtype.itemsize

    # ---- Pack P tokens per output row so the store lane dim is 128-aligned.
    P = 128 // math.gcd(TT, 128)
    w_big_bytes = (P * H) * (P * TT) * in_b
    if P > 1 and w_big_bytes > 4 * 1024 * 1024:
        # TODO(synk): for large H*P, emit P separate K=H matmuls into adjacent
        # 128-lane slices instead of the zero-padded kron weight.
        P = 1
        w_big_bytes = H * TT * in_b
    L = P * TT  # multiple of 128 whenever P > 1 or TT % 128 == 0

    # ---- Small constants, built once in the wrapper.
    w_t = weight.T.astype(f32)                                        # (H, T)
    w_flat = jnp.tile(w_t, (1, T))                                    # (H, T*T)
    w_big = jnp.kron(jnp.eye(P, dtype=f32), w_flat).astype(in_dtype)  # (P*H, L)
    tb = (transition.astype(f32) + bias.astype(f32)[None, :]).reshape(1, TT)
    tb_big = jnp.tile(tb, (1, P))                                     # (1, L) f32

    # ---- Pack the token axis; pad only the (< P)-row remainder.
    rows_needed = pl.cdiv(M, P)
    pad_rows = rows_needed * P - M
    x2 = x.reshape(M, H)
    if pad_rows:
        x2 = jnp.pad(x2, ((0, pad_rows), (0, 0)))
    xp = x2.reshape(rows_needed, P * H)  # row r holds tokens [P*r .. P*r+P-1]

    # ---- Row-tile sizing (sublane-aligned, VMEM-capped, >=2 grid steps).
    sub = 16 if (jnp.dtype(in_dtype) == jnp.dtype(jnp.bfloat16)
                 or out_dtype == jnp.dtype(jnp.bfloat16)) else 8
    if rows_needed <= sub:
        tr = rows_needed                           # single full-extent block
    else:
        blk_bytes_per_row = 2 * (P * H * in_b + L * out_b)  # double-buffered
        tr_vmem = max(sub, (12 * 1024 * 1024 // blk_bytes_per_row) // sub * sub)
        tr = min(max(tokens_per_tile // P, sub), tr_vmem)
        tr = min(tr, (rows_needed // sub) * sub)   # don't exceed the data
        if rows_needed >= 2 * sub:                 # v7x megacore: >= 2 steps
            tr = min(tr, _round_up(pl.cdiv(rows_needed, 2), sub))
        tr = max(tr, sub)
        grid0 = pl.cdiv(rows_needed, tr)           # rebalance block sizes
        tr = _round_up(pl.cdiv(rows_needed, grid0), sub)
    grid = pl.cdiv(rows_needed, tr)

    cost = pl.CostEstimate(
        flops=2 * rows_needed * (P * H) * L,
        transcendentals=0,
        bytes_accessed=(M * H * in_b + rows_needed * L * out_b
                        + w_big_bytes + L * 4),
    )

    out = pl.pallas_call(
        crf_kernel,
        out_shape=jax.ShapeDtypeStruct((rows_needed, L), out_dtype),
        grid_spec=pltpu.PrefetchScalarGridSpec(
            num_scalar_prefetch=0,
            grid=(grid,),
            in_specs=[
                pl.BlockSpec((tr, P * H), lambda i: (i, 0)),
                # w_big / tb_big have constant index_maps, so the pipeline never
                # re-fetches them across steps; at <= 4 MiB they are left with
                # default buffering (single-buffering them saves ~nothing here).
                pl.BlockSpec((P * H, L), lambda i: (0, 0)),
                pl.BlockSpec((1, L), lambda i: (0, 0)),
            ],
            out_specs=pl.BlockSpec((tr, L), lambda i: (i, 0)),
        ),
        compiler_params=pltpu.CompilerParams(
            dimension_semantics=("parallel",),
            vmem_limit_bytes=32 * 1024 * 1024,
        ),
        cost_estimate=cost,
    )(xp, w_big, tb_big)

    # (rows_needed, P*T*T) is contiguous token-major; unpack and drop padding.
    # TODO(synk): if the consumer is the CRF forward/Viterbi recursion, fuse the
    # `+ transition` broadcast there instead of materializing (B,S,T,T) at all.
    return out.reshape(rows_needed * P, T, T)[:M].reshape(B, S, T, T)


if __name__ == "__main__":
    # Small shapes consistent with the module: CRF over token sequences.
    B, S, H, T = 2, 8, 32, 8  # batch, seq, input_size (hidden), num_tags

    key = jax.random.PRNGKey(0)
    kx, kw, kb, kt = jax.random.split(key, 4)

    x = jax.random.normal(kx, (B, S, H), dtype=jnp.float32)
    weight = jax.random.normal(kw, (T, H), dtype=jnp.float32) * 0.1
    bias = jax.random.normal(kb, (T,), dtype=jnp.float32) * 0.1
    # The module zero-inits `transition`; use a small nonzero matrix (as a
    # trained parameter would be) so the broadcast path is actually exercised.
    transition = jax.random.normal(kt, (T, T), dtype=jnp.float32) * 0.1

    # Reference in plain JAX (same semantics as the PyTorch forward).
    em_ref = x @ weight.T + bias                          # (B, S, T)
    ref = em_ref[:, :, None, :] + transition[None, None]  # (B, S, T, T)

    # 1) Exact-dtype path (matches the module: f32 in, f32 out).
    scores = jax.block_until_ready(crf_forward(x, weight, bias, transition))
    assert scores.shape == (B, S, T, T)
    assert jnp.allclose(scores, ref, atol=1e-5, rtol=1e-5)

    # 2) Store-bound fast path: bf16 input + bf16 output (f32 accumulate).
    scores_bf16 = jax.block_until_ready(
        crf_forward(x.astype(jnp.bfloat16), weight, bias, transition,
                    out_dtype=jnp.bfloat16))
    assert scores_bf16.dtype == jnp.dtype(jnp.bfloat16)
    assert jnp.allclose(scores_bf16.astype(jnp.float32), ref,
                        atol=5e-2, rtol=5e-2)

    # 3) Ragged shape exercising the odd-M remainder pad + partial edge blocks.
    B3, S3 = 3, 7
    x3 = jax.random.normal(jax.random.PRNGKey(1), (B3, S3, H), dtype=jnp.float32)
    ref3 = (x3 @ weight.T + bias)[:, :, None, :] + transition[None, None]
    scores3 = jax.block_until_ready(crf_forward(x3, weight, bias, transition))
    assert scores3.shape == (B3, S3, T, T)
    assert jnp.allclose(scores3, ref3, atol=1e-5, rtol=1e-5)

    print("KERNEL_OK")
</pallas_src>

<mosaic_0001>
module attributes {stable_mosaic.version = 11 : i64} {
  func.func @crf_kernel(%arg0: i32, %arg1: memref<8x64xf32, #tpu.memory_space<vmem>>, %arg2: memref<64x128xf32, #tpu.memory_space<vmem>>, %arg3: memref<1x128xf32, #tpu.memory_space<vmem>>, %arg4: memref<8x128xf32, #tpu.memory_space<vmem>>) attributes {dimension_semantics = [#tpu.dimension_semantics<parallel>], iteration_bounds = array<i64: 1>, scalar_prefetch = 0 : i64, scratch_operands = 0 : i64, tpu.core_type = #tpu.core_type<tc>, window_params = [{transform_indices = @transform_0, window_bounds = array<i64: 8, 64>}, {pipeline_mode = #tpu.pipeline_mode<synchronous>, transform_indices = @transform_1, window_bounds = array<i64: 64, 128>}, {pipeline_mode = #tpu.pipeline_mode<synchronous>, transform_indices = @transform_2, window_bounds = array<i64: 1, 128>}, {transform_indices = @transform_3, window_bounds = array<i64: 8, 128>}]} {
    %c0 = arith.constant 0 : index
    %c0_0 = arith.constant 0 : index
    %0 = vector.load %arg1[%c0, %c0_0] : memref<8x64xf32, #tpu.memory_space<vmem>>, vector<8x64xf32>
    %c0_1 = arith.constant 0 : index
    %c0_2 = arith.constant 0 : index
    %1 = vector.load %arg2[%c0_1, %c0_2] : memref<64x128xf32, #tpu.memory_space<vmem>>, vector<64x128xf32>
    %cst = arith.constant dense<0.000000e+00> : vector<8x128xf32>
    %2 = tpu.matmul %0, %1, %cst {dimension_numbers = #tpu.dot_dimension_numbers<[1], [0], [0], [1], [0, 0, 1, 1], [], []>} : vector<8x64xf32>, vector<64x128xf32>, vector<8x128xf32> -> vector<8x128xf32>
    %c0_3 = arith.constant 0 : index
    %c0_4 = arith.constant 0 : index
    %3 = vector.load %arg3[%c0_3, %c0_4] : memref<1x128xf32, #tpu.memory_space<vmem>>, vector<1x128xf32>
    %4 = vector.broadcast %3 : vector<1x128xf32> to vector<8x128xf32>
    %5 = arith.addf %2, %4 : vector<8x128xf32>
    %c0_5 = arith.constant 0 : index
    %c0_6 = arith.constant 0 : index
    %6 = vector.load %arg4[%c0_5, %c0_6] : memref<8x128xf32, #tpu.memory_space<vmem>>, vector<8x128xf32>
    tpu.vector_store %arg4[%c0_5, %c0_6], %5 {strides = array<i32>} : memref<8x128xf32, #tpu.memory_space<vmem>>, vector<8x128xf32>,
    return
  }
  func.func @transform_0(%arg0: i32) -> (i32, i32) {
    %c0_i32 = arith.constant 0 : i32
    %c0_i32_0 = arith.constant 0 : i32
    return %arg0, %c0_i32 : i32, i32
  }
  func.func @transform_1(%arg0: i32) -> (i32, i32) {
    %c0_i32 = arith.constant 0 : i32
    %c0_i32_0 = arith.constant 0 : i32
    %c0_i32_1 = arith.constant 0 : i32
    return %c0_i32, %c0_i32_0 : i32, i32
  }
  func.func @transform_2(%arg0: i32) -> (i32, i32) {
    %c0_i32 = arith.constant 0 : i32
    %c0_i32_0 = arith.constant 0 : i32
    %c0_i32_1 = arith.constant 0 : i32
    return %c0_i32, %c0_i32_0 : i32, i32
  }
  func.func @transform_3(%arg0: i32) -> (i32, i32) {
    %c0_i32 = arith.constant 0 : i32
    %c0_i32_0 = arith.constant 0 : i32
    return %arg0, %c0_i32 : i32, i32
  }
}

</mosaic_0001>

<llo_original>
// kernel: tpu_custom_call.1
$region0: #{tpu_custom_call.1}
  #allocation0 [shape = 'u32[]', space=smem, size = 0x4, offset = 0x4, fixed_abs, tag = 'smem constant byte address 0x4 - core index']
  #allocation1 [shape = 'u32[72,128]{1,0:T(1,128)}', space=vmem, size = 0x9000, scoped, tag = 'internal scratch']
  %s0 = inlined_call_operand.hbm [shape: f32[8,64], index: 0, kind: input, shape index: {}]
  %s1 = inlined_call_operand.hbm [shape: f32[64,128], index: 1, kind: input, shape index: {}]
  %s2 = inlined_call_operand.vmem [shape: f32[1,128], index: 2, kind: input, shape index: {}]
  %s3 = inlined_call_operand.hbm [shape: f32[8,128], index: 3, kind: output, shape index: {}]
  %s4 = sld [smem:[#allocation0]]
  $region30: #{tpu_custom_call.1} parent=0
    _
  %s6 = ssub.s32 1, %s4
  %s7 = scalar_select 0, %s6, %s4
  $region1: #{tpu_custom_call.1} parent=0
    #allocation2 [shape = 'u8[4096]{0}', space=vmem, size = 0x1000, scoped, tag = 'input window, operand 0, single buffered']
    #allocation3 [shape = 's32[1]{0}', space=sflag, size = 0x4, scoped, tag = 'scoped memory for tpu_custom_call.1']
    #allocation4 [shape = 's32[1]{0}', space=sflag, size = 0x4, scoped, tag = 'scoped memory for tpu_custom_call.1']
    #allocation5 [shape = 'u8[32768]{0}', space=vmem, size = 0x8000, scoped, tag = 'input window, operand 1, single buffered']
    #allocation6 [shape = 's32[1]{0}', space=sflag, size = 0x4, scoped, tag = 'scoped memory for tpu_custom_call.1']
    #allocation7 [shape = 'u8[4096]{0}', space=vmem, size = 0x1000, scoped, tag = 'output window, operand 0, single buffered']
    %8 = vsyncpa [#allocation3], 0
    %9 = vsyncpa [#allocation6], 0
    %10 = vsyncpa [#allocation4], 0
    // Predicated region
    $region2: #{tpu_custom_call.1} parent=1 // pred_check
      _
    $region3: #{tpu_custom_call.1} parent=1 // pred_check_branch
      %12 = sbr.rel (0) target = $region5
    $region4: #{tpu_custom_call.1} parent=1 // pred_region
      %14 = vsyncadd [#allocation3], 0
      %s16 = sshll.u32 %s0, 4
      %s17 = int_to_ptr.hbm [resolvable:$true] %s16
      %s18 = sshll.u32 [#allocation2], 4
      %s19 = int_to_ptr.vmem [resolvable:$true] %s18
      %21 = dma.hbm_to_vmem [thread:$0]  %s17, 128, %s19, [#allocation3]
    $region5: #{tpu_custom_call.1} parent=1 // pred_fallthru
      _
    // Predicated region
    $region6: #{tpu_custom_call.1} parent=1 // pred_check
      _
    $region7: #{tpu_custom_call.1} parent=1 // pred_check_branch
      %23 = sbr.rel (0) target = $region9
    $region8: #{tpu_custom_call.1} parent=1 // pred_region
      %25 = vsyncadd [#allocation6], 0
      %s26 = sshll.u32 %s1, 4
      %s27 = int_to_ptr.hbm [resolvable:$true] %s26
      %s28 = sshll.u32 [#allocation5], 4
      %s29 = int_to_ptr.vmem [resolvable:$true] %s28
      %34 = dma.hbm_to_vmem [thread:$0]  %s27, 1024, %s29, [#allocation6], 128, 128, 8
    $region9: #{tpu_custom_call.1} parent=1 // pred_fallthru
      _
    // Predicated region
    $region10: #{tpu_custom_call.1} parent=1 // pred_check
      _
    $region11: #{tpu_custom_call.1} parent=1 // pred_check_branch
      %36 = sbr.rel (0) target = $region13
    $region12: #{tpu_custom_call.1} parent=1 // pred_region
      _
    $region13: #{tpu_custom_call.1} parent=1 // pred_fallthru
      _
    // Predicated region
    $region14: #{tpu_custom_call.1} parent=1 // pred_check
      _
    $region15: #{tpu_custom_call.1} parent=1 // pred_check_branch
      %38 = sbr.rel (0) target = $region17
    $region16: #{tpu_custom_call.1} parent=1 // pred_region
      %40 = dma.done [#allocation3], 128
    $region17: #{tpu_custom_call.1} parent=1 // pred_fallthru
      _
    // Predicated region
    $region18: #{tpu_custom_call.1} parent=1 // pred_check
      _
    $region19: #{tpu_custom_call.1} parent=1 // pred_check_branch
      %42 = sbr.rel (0) target = $region21
    $region20: #{tpu_custom_call.1} parent=1 // pred_region
      %44 = dma.done [#allocation6], 1024
    $region21: #{tpu_custom_call.1} parent=1 // pred_fallthru
      _
    %v45 = vld [vmem:[#allocation2] sm:$0xff]
    %v46 = vld [vmem:[#allocation5] sm:$0xff]
    %v47 = vld [vmem:[#allocation5 + $0x8] sm:$0xff]
    %v48 = vld [vmem:[#allocation5 + $0x10] sm:$0xff]
    %v49 = vld [vmem:[#allocation5 + $0x18] sm:$0xff]
    %v50 = vld [vmem:[#allocation5 + $0x20] sm:$0xff]
    %v51 = vld [vmem:[#allocation5 + $0x28] sm:$0xff]
    %v52 = vld [vmem:[#allocation5 + $0x30] sm:$0xff]
    %v53 = vld [vmem:[#allocation5 + $0x38] sm:$0xff]
    %v54 = vld [vmem:[%s2] sm:$0x1]
    %v56 = vperm.slane %v54, 0
    %vm58 = vcmask 523264
    %v60 = vsel %vm58, %v45, 0
    %62 = vmatpush.msra.mxu0 0.0
    %63 = vmatpush.msra.mxu0 0.0
    %64 = vmatpush.msra.mxu0 0.0
    %65 = vmatpush.msra.mxu0 0.0
    %66 = vmatpush.msra.mxu0 0.0
    %67 = vmatpush.msra.mxu0 0.0
    %68 = vmatpush.msra.mxu0 0.0
    %69 = vmatpush.msra.mxu0 0.0
    %70 = vmatpush.msra.mxu0 %v53
    %71 = vmatpush.msra.mxu0 %v52
    %72 = vmatpush.msra.mxu0 %v51
    %73 = vmatpush.msra.mxu0 %v50
    %74 = vmatpush.msra.mxu0 %v49
    %75 = vmatpush.msra.mxu0 %v48
    %76 = vmatpush.msra.mxu0 %v47
    %77 = vmatpush.msra.mxu0 %v46
    %78 = vmatmul.f32.gmra.mxu0 %v60
    %v79 = vpop.f32.mrf.mxu0
    %v80 = vadd.f32 %v56, %v79
    %81 = vdwg.mxu0
    %82 = vst [vmem:[#allocation7] sm:$0xff] %v80
    // Predicated region
    $region22: #{tpu_custom_call.1} parent=1 // pred_check
      _
    $region23: #{tpu_custom_call.1} parent=1 // pred_check_branch
      %84 = sbr.rel (0) target = $region25
    $region24: #{tpu_custom_call.1} parent=1 // pred_region
      %86 = vsyncadd [#allocation4], 0
      %s88 = sshll.u32 [#allocation7], 4
      %s89 = int_to_ptr.vmem [resolvable:$true] %s88
      %s90 = sshll.u32 %s3, 4
      %s91 = int_to_ptr.hbm [resolvable:$true] %s90
      %93 = dma.vmem_to_hbm [thread:$0]  %s89, 128, %s91, [#allocation4]
    $region25: #{tpu_custom_call.1} parent=1 // pred_fallthru
      _
    // Predicated region
    $region26: #{tpu_custom_call.1} parent=1 // pred_check
      _
    $region27: #{tpu_custom_call.1} parent=1 // pred_check_branch
      %95 = sbr.rel (0) target = $region29
    $region28: #{tpu_custom_call.1} parent=1 // pred_region
      %97 = dma.done [#allocation4], 128
    $region29: #{tpu_custom_call.1} parent=1 // pred_fallthru
      _
    %98 = vsyncpa [#allocation3], 1
    %99 = vsyncpa [#allocation6], 1
    %100 = vsyncpa [#allocation4], 1

</llo_original>
